<compile_context>
chip_gen: v5e
topology: v5e:2x2
jax: 0.10.0
libtpu: 0.0.40
codegen_flags: <defaults>
</compile_context>

<pallas_src>
import jax
import jax.numpy as jnp
from jax.experimental import pallas as pl
from jax.experimental.pallas import tpu as pltpu

LANE = 128                    # TPU lane width
TB_MAX = 65536                # default batch-tile cap (lanes); ~26 MiB peak VMEM
_MEGACORE_SPLIT_MIN = 16384   # split batches >= this into >=2 tiles (v7x megacore)
_VMEM_LIMIT_BYTES = 48 * 1024 * 1024


def _mlp_kernel(xt_ref, w1_ref, b1_ref, w2_ref, b2_ref, o_ref):
    # xt_ref: (5, TB)   feature-major input tile (batch on the lane axis)
    # w1_ref: (32, 5)   PyTorch nn.Linear layout (out, in)
    # b1_ref: (32, 1)
    # w2_ref: (1, 32)
    # b2_ref: (1,)      scalar bias in SMEM
    # o_ref : (1, TB)   lane-dense output tile
    h = jnp.dot(w1_ref[...], xt_ref[...],
                preferred_element_type=jnp.float32)        # (32, TB) on the MXU
    h = jnp.maximum(h + b1_ref[...], 0.0)                  # bias + ReLU (VPU)
    out = jnp.dot(w2_ref[...], h,
                  preferred_element_type=jnp.float32)      # (1, TB), lane-dense
    o_ref[...] = (out + b2_ref[0]).astype(o_ref.dtype)


def _pick_tb(batch, tb_max):
    """Batch-tile size: biggest tile that fits VMEM, with two extra rules:
    - partial trailing blocks are fine, so no padding is ever needed;
    - moderately large batches are split into >=2 tiles so a v7x megacore can
      shard the (parallel) batch axis across both TensorCores."""
    if batch > tb_max:
        return tb_max                                    # multiple of 128
    if batch >= _MEGACORE_SPLIT_MIN:
        return LANE * pl.cdiv(pl.cdiv(batch, 2), LANE)   # ~B/2, multiple of 128
    return batch                                         # single full-array block


def residual_ml_model_t(xt, w1, b1, w2, b2, *, tb_max=TB_MAX):
    """Forward pass with feature-major input (no wrapper-side copies).

    xt: (5, B) float32       -- x transposed (batch on the trailing axis)
    w1: (32, 5), b1: (32,)   -- first Linear, PyTorch (out, in) layout
    w2: (1, 32), b2: (1,)    -- second Linear
    returns (B, 1) float32
    """
    F, B = xt.shape
    assert F == 5 and w1.shape == (32, 5) and w2.shape == (1, 32)
    assert tb_max % LANE == 0

    tb = _pick_tb(B, tb_max)
    grid = (pl.cdiv(B, tb),)

    out = pl.pallas_call(
        _mlp_kernel,
        out_shape=jax.ShapeDtypeStruct((1, B), jnp.float32),
        grid=grid,
        in_specs=[
            pl.BlockSpec((5, tb), lambda i: (0, i)),     # x tile (batch on lanes)
            pl.BlockSpec((32, 5), lambda i: (0, 0)),     # w1, VMEM-resident
            pl.BlockSpec((32, 1), lambda i: (0, 0)),     # b1
            pl.BlockSpec((1, 32), lambda i: (0, 0)),     # w2
            pl.BlockSpec(memory_space=pltpu.MemorySpace.SMEM),  # b2 scalar
        ],
        out_specs=pl.BlockSpec((1, tb), lambda i: (0, i)),
        compiler_params=pltpu.CompilerParams(
            dimension_semantics=("parallel",),           # megacore on v7x
            vmem_limit_bytes=_VMEM_LIMIT_BYTES,
        ),
    )(xt.astype(jnp.float32),
      w1.astype(jnp.float32),
      b1.reshape(32, 1).astype(jnp.float32),
      w2.astype(jnp.float32),
      b2.reshape(1).astype(jnp.float32))

    return out.reshape(B, 1)          # (1, B) -> (B, 1) is a free bitcast


def residual_ml_model(x, w1, b1, w2, b2, *, tb_max=TB_MAX):
    """PyTorch-layout interface: x is (B, 5).

    Pays exactly one feature-major copy (x.T).  If the producer can emit x as
    (5, B), call residual_ml_model_t directly and skip that copy too.
    """
    B, F = x.shape
    assert F == 5
    return residual_ml_model_t(x.T, w1, b1, w2, b2, tb_max=tb_max)


def init_params(key):
    """Deterministic params in PyTorch nn.Linear (out, in) layout."""
    k1, k2, k3, k4 = jax.random.split(key, 4)
    w1 = jax.random.uniform(k1, (32, 5), jnp.float32, -0.4, 0.4)
    b1 = jax.random.uniform(k2, (32,), jnp.float32, -0.4, 0.4)
    w2 = jax.random.uniform(k3, (1, 32), jnp.float32, -0.17, 0.17)
    b2 = jax.random.uniform(k4, (1,), jnp.float32, -0.17, 0.17)
    return w1, b1, w2, b2


def _reference(x, w1, b1, w2, b2):
    # Same math as the PyTorch forward: Linear(5,32) -> ReLU -> Linear(32,1).
    return jnp.maximum(x @ w1.T + b1, 0.0) @ w2.T + b2


if __name__ == "__main__":
    key = jax.random.PRNGKey(0)
    kx1, kx2, kx3, kp = jax.random.split(key, 4)
    w1, b1, w2, b2 = init_params(kp)

    # 1) Small batch, single full-array block, PyTorch (B, 5) interface.
    x1 = jax.random.normal(kx1, (8, 5), jnp.float32)
    o1 = jax.block_until_ready(residual_ml_model(x1, w1, b1, w2, b2))
    assert o1.shape == (8, 1)
    assert jnp.allclose(o1, _reference(x1, w1, b1, w2, b2), atol=1e-5, rtol=1e-5)

    # 2) Multi-tile + partial trailing block (small tile override).
    x2 = jax.random.normal(kx2, (1000, 5), jnp.float32)
    o2 = jax.block_until_ready(residual_ml_model(x2, w1, b1, w2, b2, tb_max=256))
    assert o2.shape == (1000, 1)
    assert jnp.allclose(o2, _reference(x2, w1, b1, w2, b2), atol=1e-5, rtol=1e-5)

    # 3) Default big-tile path: two 64K-lane tiles with a partial trailing
    #    block, via the copy-free feature-major entry point.
    B3 = TB_MAX + 37
    x3 = jax.random.normal(kx3, (B3, 5), jnp.float32)
    o3 = jax.block_until_ready(residual_ml_model_t(x3.T, w1, b1, w2, b2))
    assert o3.shape == (B3, 1)
    assert jnp.allclose(o3, _reference(x3, w1, b1, w2, b2), atol=1e-5, rtol=1e-5)

    print("KERNEL_OK")
</pallas_src>

<mosaic_0001>
module attributes {stable_mosaic.version = 11 : i64} {
  func.func @_mlp_kernel(%arg0: i32, %arg1: memref<5x8xf32, #tpu.memory_space<vmem>>, %arg2: memref<32x5xf32, #tpu.memory_space<vmem>>, %arg3: memref<32x1xf32, #tpu.memory_space<vmem>>, %arg4: memref<1x32xf32, #tpu.memory_space<vmem>>, %arg5: memref<1xf32, #tpu.memory_space<smem>>, %arg6: memref<1x8xf32, #tpu.memory_space<vmem>>) attributes {dimension_semantics = [#tpu.dimension_semantics<parallel>], iteration_bounds = array<i64: 1>, scalar_prefetch = 0 : i64, scratch_operands = 0 : i64, tpu.core_type = #tpu.core_type<tc>, window_params = [{transform_indices = @transform_0, window_bounds = array<i64: 5, 8>}, {pipeline_mode = #tpu.pipeline_mode<synchronous>, transform_indices = @transform_1, window_bounds = array<i64: 32, 5>}, {pipeline_mode = #tpu.pipeline_mode<synchronous>, transform_indices = @transform_2, window_bounds = array<i64: 32, 1>}, {pipeline_mode = #tpu.pipeline_mode<synchronous>, transform_indices = @transform_3, window_bounds = array<i64: 1, 32>}, {transform_indices = @transform_4, window_bounds = array<i64: 1>}, {transform_indices = @transform_5, window_bounds = array<i64: 1, 8>}]} {
    %c0 = arith.constant 0 : index
    %c0_0 = arith.constant 0 : index
    %0 = vector.load %arg2[%c0, %c0_0] : memref<32x5xf32, #tpu.memory_space<vmem>>, vector<32x5xf32>
    %c0_1 = arith.constant 0 : index
    %c0_2 = arith.constant 0 : index
    %1 = vector.load %arg1[%c0_1, %c0_2] : memref<5x8xf32, #tpu.memory_space<vmem>>, vector<5x8xf32>
    %cst = arith.constant dense<0.000000e+00> : vector<32x8xf32>
    %2 = tpu.matmul %0, %1, %cst {dimension_numbers = #tpu.dot_dimension_numbers<[1], [0], [0], [1], [0, 0, 1, 1], [], []>} : vector<32x5xf32>, vector<5x8xf32>, vector<32x8xf32> -> vector<32x8xf32>
    %c0_3 = arith.constant 0 : index
    %c0_4 = arith.constant 0 : index
    %3 = vector.load %arg3[%c0_3, %c0_4] : memref<32x1xf32, #tpu.memory_space<vmem>>, vector<32x1xf32>
    %4 = vector.broadcast %3 : vector<32x1xf32> to vector<32x8xf32>
    %5 = arith.addf %2, %4 : vector<32x8xf32>
    %cst_5 = arith.constant 0.000000e+00 : f32
    %6 = vector.broadcast %cst_5 : f32 to vector<32x8xf32>
    %7 = arith.maximumf %5, %6 : vector<32x8xf32>
    %c0_6 = arith.constant 0 : index
    %c0_7 = arith.constant 0 : index
    %8 = vector.load %arg4[%c0_6, %c0_7] : memref<1x32xf32, #tpu.memory_space<vmem>>, vector<1x32xf32>
    %cst_8 = arith.constant dense<0.000000e+00> : vector<1x8xf32>
    %9 = tpu.matmul %8, %7, %cst_8 {dimension_numbers = #tpu.dot_dimension_numbers<[1], [0], [0], [1], [0, 0, 1, 1], [], []>} : vector<1x32xf32>, vector<32x8xf32>, vector<1x8xf32> -> vector<1x8xf32>
    %c0_9 = arith.constant 0 : index
    %10 = memref.load %arg5[%c0_9] : memref<1xf32, #tpu.memory_space<smem>>
    %11 = vector.broadcast %10 : f32 to vector<1x8xf32>
    %12 = arith.addf %9, %11 : vector<1x8xf32>
    %c0_10 = arith.constant 0 : index
    %c0_11 = arith.constant 0 : index
    %13 = vector.load %arg6[%c0_10, %c0_11] : memref<1x8xf32, #tpu.memory_space<vmem>>, vector<1x8xf32>
    tpu.vector_store %arg6[%c0_10, %c0_11], %12 {strides = array<i32>} : memref<1x8xf32, #tpu.memory_space<vmem>>, vector<1x8xf32>,
    return
  }
  func.func @transform_0(%arg0: i32) -> (i32, i32) {
    %c0_i32 = arith.constant 0 : i32
    %c0_i32_0 = arith.constant 0 : i32
    return %c0_i32, %arg0 : i32, i32
  }
  func.func @transform_1(%arg0: i32) -> (i32, i32) {
    %c0_i32 = arith.constant 0 : i32
    %c0_i32_0 = arith.constant 0 : i32
    %c0_i32_1 = arith.constant 0 : i32
    return %c0_i32, %c0_i32_0 : i32, i32
  }
  func.func @transform_2(%arg0: i32) -> (i32, i32) {
    %c0_i32 = arith.constant 0 : i32
    %c0_i32_0 = arith.constant 0 : i32
    %c0_i32_1 = arith.constant 0 : i32
    return %c0_i32, %c0_i32_0 : i32, i32
  }
  func.func @transform_3(%arg0: i32) -> (i32, i32) {
    %c0_i32 = arith.constant 0 : i32
    %c0_i32_0 = arith.constant 0 : i32
    %c0_i32_1 = arith.constant 0 : i32
    return %c0_i32, %c0_i32_0 : i32, i32
  }
  func.func @transform_4(%arg0: i32) -> i32 {
    %c0_i32 = arith.constant 0 : i32
    %c0_i32_0 = arith.constant 0 : i32
    return %c0_i32 : i32
  }
  func.func @transform_5(%arg0: i32) -> (i32, i32) {
    %c0_i32 = arith.constant 0 : i32
    %c0_i32_0 = arith.constant 0 : i32
    return %c0_i32, %arg0 : i32, i32
  }
}

</mosaic_0001>

<llo_original>
// kernel: tpu_custom_call.1
$region0: #{tpu_custom_call.1}
  #allocation0 [shape = 'u32[]', space=smem, size = 0x4, offset = 0x4, fixed_abs, tag = 'smem constant byte address 0x4 - core index']
  #allocation1 [shape = 'u32[72,128]{1,0:T(1,128)}', space=vmem, size = 0x9000, scoped, tag = 'internal scratch']
  #allocation2 [shape = 'f32[1]{0:T(128)S(6)}', space=smem, size = 0x200, scoped, tag = 'scoped memory for tpu_custom_call.1']
  %s0 = inlined_call_operand.vmem [shape: f32[5,8], index: 0, kind: input, shape index: {}]
  %s1 = inlined_call_operand.vmem [shape: f32[32,5], index: 1, kind: input, shape index: {}]
  %s2 = inlined_call_operand.vmem [shape: f32[32,1], index: 2, kind: input, shape index: {}]
  %s3 = inlined_call_operand.vmem [shape: f32[1,32], index: 3, kind: input, shape index: {}]
  %s4 = inlined_call_operand.<no memory space> [shape: f32[1], index: 4, kind: input, shape index: {}]
  %s5 = inlined_call_operand.hbm [shape: f32[1,8], index: 5, kind: output, shape index: {}]
  %s6 = sld [smem:[#allocation0]]
  $region30: #{tpu_custom_call.1} parent=0
    _
  %s8 = ssub.s32 1, %s6
  %s9 = scalar_select 0, %s8, %s6
  %10 = sst [smem:[#allocation2]] %s4
  $region1: #{tpu_custom_call.1} parent=0
    #allocation3 [shape = 'u8[512]{0}', space=vmem, size = 0x400, scoped, tag = 'output window, operand 0, single buffered']
    #allocation4 [shape = 's32[1]{0}', space=sflag, size = 0x4, scoped, tag = 'scoped memory for tpu_custom_call.1']
    %11 = vsyncpa [#allocation4], 0
    // Predicated region
    $region2: #{tpu_custom_call.1} parent=1 // pred_check
      _
    $region3: #{tpu_custom_call.1} parent=1 // pred_check_branch
      %13 = sbr.rel (0) target = $region5
    $region4: #{tpu_custom_call.1} parent=1 // pred_region
      _
    $region5: #{tpu_custom_call.1} parent=1 // pred_fallthru
      _
    // Predicated region
    $region6: #{tpu_custom_call.1} parent=1 // pred_check
      _
    $region7: #{tpu_custom_call.1} parent=1 // pred_check_branch
      %15 = sbr.rel (0) target = $region9
    $region8: #{tpu_custom_call.1} parent=1 // pred_region
      _
    $region9: #{tpu_custom_call.1} parent=1 // pred_fallthru
      _
    // Predicated region
    $region10: #{tpu_custom_call.1} parent=1 // pred_check
      _
    $region11: #{tpu_custom_call.1} parent=1 // pred_check_branch
      %17 = sbr.rel (0) target = $region13
    $region12: #{tpu_custom_call.1} parent=1 // pred_region
      _
    $region13: #{tpu_custom_call.1} parent=1 // pred_fallthru
      _
    // Predicated region
    $region14: #{tpu_custom_call.1} parent=1 // pred_check
      _
    $region15: #{tpu_custom_call.1} parent=1 // pred_check_branch
      %19 = sbr.rel (0) target = $region17
    $region16: #{tpu_custom_call.1} parent=1 // pred_region
      _
    $region17: #{tpu_custom_call.1} parent=1 // pred_fallthru
      _
    // Predicated region
    $region18: #{tpu_custom_call.1} parent=1 // pred_check
      _
    $region19: #{tpu_custom_call.1} parent=1 // pred_check_branch
      %21 = sbr.rel (0) target = $region21
    $region20: #{tpu_custom_call.1} parent=1 // pred_region
      _
    $region21: #{tpu_custom_call.1} parent=1 // pred_fallthru
      _
    %v22 = vld [vmem:[%s1] sm:$0xff]
    %v23 = vld [vmem:[%s1 + $0x8] sm:$0xff]
    %v24 = vld [vmem:[%s1 + $0x10] sm:$0xff]
    %v25 = vld [vmem:[%s1 + $0x18] sm:$0xff]
    %v26 = vld [vmem:[%s0] sm:$0x1f]
    %v27 = vld [vmem:[%s2] sm:$0xff]
    %v28 = vld [vmem:[%s2 + $0x8] sm:$0xff]
    %v29 = vld [vmem:[%s2 + $0x10] sm:$0xff]
    %v30 = vld [vmem:[%s2 + $0x18] sm:$0xff]
    %32 = vset.pattern.permute.xlu0 0
    %33 = vperm.xlu0 %32, %v27
    %v34 = vpop.permute.xlu0 %33
    %37 = vset.pattern.permute.xlu0 0
    %38 = vperm.xlu0 %37, %v28
    %v39 = vpop.permute.xlu0 %38
    %42 = vset.pattern.permute.xlu0 0
    %43 = vperm.xlu0 %42, %v29
    %v44 = vpop.permute.xlu0 %43
    %47 = vset.pattern.permute.xlu0 0
    %48 = vperm.xlu0 %47, %v30
    %v49 = vpop.permute.xlu0 %48
    %vm51 = vcmask 39936
    %v53 = vsel %vm51, %v22, 0
    %v56 = vsel %vm51, %v23, 0
    %v59 = vsel %vm51, %v24, 0
    %v62 = vsel %vm51, %v25, 0
    %vm64 = vcmask 1044480
    %v66 = vsel %vm64, %v26, 0
    %68 = vmatpush.msra.mxu0 0.0
    %69 = vmatpush.msra.mxu0 0.0
    %70 = vmatpush.msra.mxu0 0.0
    %71 = vmatpush.msra.mxu0 0.0
    %72 = vmatpush.msra.mxu0 0.0
    %73 = vmatpush.msra.mxu0 0.0
    %74 = vmatpush.msra.mxu0 0.0
    %75 = vmatpush.msra.mxu0 0.0
    %76 = vmatpush.msra.mxu0 0.0
    %77 = vmatpush.msra.mxu0 0.0
    %78 = vmatpush.msra.mxu0 0.0
    %79 = vmatpush.msra.mxu0 0.0
    %80 = vmatpush.msra.mxu0 0.0
    %81 = vmatpush.msra.mxu0 0.0
    %82 = vmatpush.msra.mxu0 0.0
    %83 = vmatpush.msra.mxu0 %v66
    %84 = vmatmul.f32.gmra.mxu0 %v53
    %v85 = vpop.f32.mrf.mxu0
    %v86 = vadd.f32 %v34, %v85
    %87 = vmatmul.f32.gmra.mxu0 %v56
    %v88 = vpop.f32.mrf.mxu0
    %v89 = vadd.f32 %v39, %v88
    %90 = vmatmul.f32.gmra.mxu0 %v59
    %v91 = vpop.f32.mrf.mxu0
    %v92 = vadd.f32 %v44, %v91
    %93 = vmatmul.f32.gmra.mxu0 %v62
    %v94 = vpop.f32.mrf.mxu0
    %v95 = vadd.f32 %v49, %v94
    %96 = vdwg.mxu0
    %v97 = vmax.f32 %v86, 0.0
    %v98 = vmax.f32 %v89, 0.0
    %v99 = vmax.f32 %v92, 0.0
    %v100 = vmax.f32 %v95, 0.0
    %v101 = vld [vmem:[%s3] sm:$0x1]
    %s102 = sld [smem:[#allocation2]]
    %v103 = vstv %s102
    %vm104 = vcmask 261120
    %v106 = vsel %vm104, %v101, 0
    %108 = vmatpush.msra.mxu0 0.0
    %109 = vmatpush.msra.mxu0 0.0
    %110 = vmatpush.msra.mxu0 0.0
    %111 = vmatpush.msra.mxu0 0.0
    %112 = vmatpush.msra.mxu0 0.0
    %113 = vmatpush.msra.mxu0 0.0
    %114 = vmatpush.msra.mxu0 0.0
    %115 = vmatpush.msra.mxu0 0.0
    %116 = vmatpush.msra.mxu0 0.0
    %117 = vmatpush.msra.mxu0 0.0
    %118 = vmatpush.msra.mxu0 0.0
    %119 = vmatpush.msra.mxu0 0.0
    %120 = vmatpush.msra.mxu0 %v100
    %121 = vmatpush.msra.mxu0 %v99
    %122 = vmatpush.msra.mxu0 %v98
    %123 = vmatpush.msra.mxu0 %v97
    %124 = vmatmul.f32.gmra.mxu0 %v106
    %v125 = vpop.f32.mrf.mxu0
    %v126 = vadd.f32 %v103, %v125
    %127 = vdwg.mxu0
    %vm128 = vcmask 57344
    %129 = vst.msk [vmem:[#allocation3] sm:$0x1] %vm128, %v126
    // Predicated region
    $region22: #{tpu_custom_call.1} parent=1 // pred_check
      _
    $region23: #{tpu_custom_call.1} parent=1 // pred_check_branch
      %131 = sbr.rel (0) target = $region25
    $region24: #{tpu_custom_call.1} parent=1 // pred_region
      %133 = vsyncadd [#allocation4], 0
      %s135 = sshll.u32 [#allocation3], 4
      %s136 = int_to_ptr.vmem [resolvable:$true] %s135
      %s137 = sshll.u32 %s5, 4
      %s138 = int_to_ptr.hbm [resolvable:$true] %s137
      %140 = dma.vmem_to_hbm [thread:$0]  %s136, 16, %s138, [#allocation4]
    $region25: #{tpu_custom_call.1} parent=1 // pred_fallthru
      _
    // Predicated region
    $region26: #{tpu_custom_call.1} parent=1 // pred_check
      _
    $region27: #{tpu_custom_call.1} parent=1 // pred_check_branch
      %142 = sbr.rel (0) target = $region29
    $region28: #{tpu_custom_call.1} parent=1 // pred_region
      %144 = dma.done [#allocation4], 16
    $region29: #{tpu_custom_call.1} parent=1 // pred_fallthru
      _
    %145 = vsyncpa [#allocation4], 1

</llo_original>
